<compile_context>
chip_gen: v6e
topology: v6e:2x2x1
jax: 0.10.0
libtpu: 0.0.40
codegen_flags: <defaults>
</compile_context>

<pallas_src>
import jax
import jax.numpy as jnp
from jax.experimental import pallas as pl
from jax.experimental.pallas import tpu as pltpu


def _rup(n, m):
    return ((n + m - 1) // m) * m


# ----------------------------- Pallas kernel --------------------------------


def _make_kernel(layout):
    """Build the fused forward kernel with all offsets baked in as Python ints."""
    h1, h2, h3 = layout["h1"], layout["h2"], layout["h3"]
    hp = layout["head_pad"]
    wo2, wo3, woh = layout["w_offs"]
    bo1, bo2, bo3, boh, bov, bob = layout["b_offs"]

    def kernel(x_ref, w1_ref, w_ref, b_ref, out_ref):
        def mm(a, w):
            # cast activations to the weight storage dtype (bf16 or f32); f32 accumulate
            return jnp.dot(a.astype(w.dtype), w, preferred_element_type=jnp.float32)

        x = x_ref[...]

        # layer 1 kept f32 (tiny FLOPs; preserves raw-input dynamic range)
        h = jnp.maximum(mm(x, w1_ref[...]) + b_ref[:, bo1:bo1 + h1], 0.0)
        # layers 2/3 + fused heads on the MXU in the packed compute dtype
        h = jnp.maximum(mm(h, w_ref[:h1, wo2:wo2 + h2]) + b_ref[:, bo2:bo2 + h2], 0.0)
        h = jnp.maximum(mm(h, w_ref[:h2, wo3:wo3 + h3]) + b_ref[:, bo3:bo3 + h3], 0.0)

        # fused heads: cols [0,64) = value hidden (pre-ReLU), [64,64+nb) = logits,
        # remaining cols zero (last col reserved for the state value)
        head = mm(h, w_ref[:h3, woh:woh + hp]) + b_ref[:, boh:boh + hp]   # [bt, hp] f32

        # value head final layer: VPU multiply + lane reduction (wv2 is zero outside
        # the value-hidden columns, so ReLU'd logits contribute nothing)
        v = jnp.maximum(head, 0.0) * b_ref[:, bov:bov + hp]
        value = jnp.sum(v, axis=-1, keepdims=True) + b_ref[0:1, bob:bob + 1]  # [bt, 1]

        # dense store of the slab + one narrow column store for the value
        out_ref[...] = head.astype(out_ref.dtype)
        out_ref[:, hp - 1:hp] = value.astype(out_ref.dtype)

    return kernel


# ------------------------------ wrapper --------------------------------------


def _pick_batch_tile(B, requested=None):
    """One grid step on 1-TC chips (v5e/v6e); two balanced steps on v7x (2 TCs)."""
    if requested is not None:
        bt = min(requested, B)
    else:
        try:
            kind = jax.devices()[0].device_kind.lower()
        except Exception:  # pragma: no cover - defensive
            kind = ""
        n_tc = 2 if "v7" in kind else 1
        if n_tc > 1 and B >= 16:
            bt = _rup(pl.cdiv(B, n_tc), 8)
            bt = min(bt, B)
        else:
            bt = B
    # cap so the [bt, h1] f32 activation stays small vs. the default scoped-VMEM limit
    bt = min(bt, 2048)
    if bt < B and bt % 8 != 0:
        bt = B  # fall back to a single step rather than violate (8,128) tiling
    return bt


def routing_forward(x, kp, meta, *, batch_tile=None):
    """x: [B, state_dim] f32. Returns (action_logits [B, nb], state_value [B, 1])."""
    B, sd = x.shape
    assert sd == meta["state_dim"]
    hp = meta["head_pad"]
    nb = meta["num_brokers"]
    off = meta["logits_off"]

    bt = _pick_batch_tile(B, batch_tile)
    grid = (pl.cdiv(B, bt),)

    w1, wslab, bslab = kp["w1"], kp["wslab"], kp["bslab"]

    in_specs = [
        pl.BlockSpec((bt, sd), lambda i: (i, 0)),
        pl.BlockSpec(w1.shape, lambda i: (0, 0)),
        pl.BlockSpec(wslab.shape, lambda i: (0, 0)),
        pl.BlockSpec(bslab.shape, lambda i: (0, 0)),
    ]
    out_specs = pl.BlockSpec((bt, hp), lambda i: (i, 0))
    out_shape = jax.ShapeDtypeStruct((B, hp), jnp.float32)

    flops = 2 * B * (sd * meta["h1"] + meta["h1"] * meta["h2"]
                     + meta["h2"] * meta["h3"] + meta["h3"] * hp) + 4 * B * hp
    bytes_accessed = (x.size * x.dtype.itemsize
                      + sum(a.size * a.dtype.itemsize for a in (w1, wslab, bslab))
                      + B * hp * 4)

    slab = pl.pallas_call(
        _make_kernel(meta),
        grid_spec=pl.GridSpec(grid=grid, in_specs=in_specs, out_specs=out_specs),
        out_shape=out_shape,
        compiler_params=pltpu.CompilerParams(dimension_semantics=("parallel",)),
        cost_estimate=pl.CostEstimate(flops=int(flops), transcendentals=0,
                                      bytes_accessed=int(bytes_accessed)),
    )(x, w1, wslab, bslab)

    # slicing stays inside the caller's jit so XLA fuses it with downstream consumers
    logits = slab[:, off:off + nb]
    value = slab[:, hp - 1:hp]
    return logits, value


# --------------------------- parameter plumbing -------------------------------


def init_params(key, state_dim, num_brokers, hidden_dims=(256, 128, 64)):
    """Raw (unfused) params mirroring the PyTorch module (eval mode)."""
    keys = jax.random.split(key, 32)
    kit = iter(keys)
    raw = {}

    def linear(fan_in, fan_out):
        bound = float(fan_in) ** -0.5
        w = jax.random.uniform(next(kit), (fan_in, fan_out), jnp.float32, -bound, bound)
        b = jax.random.uniform(next(kit), (1, fan_out), jnp.float32, -bound, bound)
        return w, b

    dims = [state_dim] + list(hidden_dims)
    for li in range(len(hidden_dims)):
        w, b = linear(dims[li], dims[li + 1])
        raw[f"w{li + 1}"], raw[f"b{li + 1}"] = w, b
        h = dims[li + 1]
        raw[f"gamma{li + 1}"] = 1.0 + 0.05 * jax.random.normal(next(kit), (1, h), jnp.float32)
        raw[f"beta{li + 1}"] = 0.05 * jax.random.normal(next(kit), (1, h), jnp.float32)
        raw[f"rm{li + 1}"] = 0.1 * jax.random.normal(next(kit), (1, h), jnp.float32)
        raw[f"rv{li + 1}"] = jax.random.uniform(next(kit), (1, h), jnp.float32, 0.5, 1.5)

    cur = hidden_dims[-1]
    raw["wa"], raw["ba"] = linear(cur, num_brokers)
    raw["wv1"], raw["bv1"] = linear(cur, 64)
    raw["wv2"], raw["bv2"] = linear(64, 1)
    return raw


def prepare_kernel_params(raw, eps=1e-5, compute_dtype=jnp.bfloat16):
    """Fold eval-mode BatchNorm into the next layer / heads, pad every hidden width
    to a multiple of 128, fuse the two heads into one lane-dense weight matrix, and
    pack everything into 3 operands (f32 w1, compute-dtype weight slab, f32 bias slab).
    Pure wrapper-side parameter glue."""
    nb = raw["wa"].shape[1]
    sd = raw["w1"].shape[0]

    def bn_affine(i):
        scale = raw[f"gamma{i}"] * jax.lax.rsqrt(raw[f"rv{i}"] + eps)
        shift = raw[f"beta{i}"] - raw[f"rm{i}"] * scale
        return scale, shift

    s1, t1 = bn_affine(1)
    s2, t2 = bn_affine(2)
    s3, t3 = bn_affine(3)

    # BN follows the ReLU; fold its affine into the NEXT linear:
    #   (h*s + t) @ W + b  ==  h @ (s.T * W) + (t @ W + b)
    w1, b1 = raw["w1"], raw["b1"]
    w2 = s1.T * raw["w2"]
    b2 = t1 @ raw["w2"] + raw["b2"]
    w3 = s2.T * raw["w3"]
    b3 = t2 @ raw["w3"] + raw["b3"]
    wa = s3.T * raw["wa"]
    ba = t3 @ raw["wa"] + raw["ba"]
    wv1 = s3.T * raw["wv1"]
    bv1 = t3 @ raw["wv1"] + raw["bv1"]
    wv2, bv2 = raw["wv2"], raw["bv2"]

    h1, h2, h3 = w1.shape[1], w2.shape[1], w3.shape[1]
    vw = wv1.shape[1]                       # value-head hidden width (64)
    h1p, h2p, h3p = _rup(h1, 128), _rup(h2, 128), _rup(h3, 128)   # lane-dense widths
    head_pad = _rup(vw + nb + 1, 128)       # +1: reserved state-value column
    off = vw                                # logits start column in the slab
    assert off + nb <= head_pad - 1, "state-value column would collide with logits"

    def pad2(a, r, c):
        return jnp.zeros((r, c), jnp.float32).at[:a.shape[0], :a.shape[1]].set(a)

    w1p, b1p = pad2(w1, sd, h1p), pad2(b1, 1, h1p)
    w2p, b2p = pad2(w2, h1p, h2p), pad2(b2, 1, h2p)
    w3p, b3p = pad2(w3, h2p, h3p), pad2(b3, 1, h3p)

    wh = jnp.zeros((h3p, head_pad), jnp.float32)
    wh = wh.at[:h3, :vw].set(wv1).at[:h3, off:off + nb].set(wa)
    bh = jnp.zeros((1, head_pad), jnp.float32)
    bh = bh.at[:, :vw].set(bv1).at[:, off:off + nb].set(ba)
    wv2p = jnp.zeros((1, head_pad), jnp.float32).at[:, :vw].set(wv2.T)
    bv2p = jnp.zeros((1, 128), jnp.float32).at[:, :1].set(bv2)

    # reserved value column must be exactly zero in the fused head
    assert bool(jnp.all(wh[:, head_pad - 1] == 0.0))
    assert bool(jnp.all(bh[:, head_pad - 1] == 0.0))
    assert bool(jnp.all(wv2p[:, head_pad - 1] == 0.0))

    # ---- compute-dtype weight slab: w2 | w3 | fused-head, column-concatenated ----
    w_offs, c = [], 0
    for width in (h2p, h3p, head_pad):
        w_offs.append(c)
        c += _rup(width, 128)
    w_rows = _rup(max(h1p, h2p, h3p), 8)
    wslab = jnp.zeros((w_rows, c), jnp.float32)
    wslab = wslab.at[:h1p, w_offs[0]:w_offs[0] + h2p].set(w2p)
    wslab = wslab.at[:h2p, w_offs[1]:w_offs[1] + h3p].set(w3p)
    wslab = wslab.at[:h3p, w_offs[2]:w_offs[2] + head_pad].set(wh)

    # ---- f32 row slab: b1 | b2 | b3 | bh | wv2 | bv2 ----
    b_parts = [b1p, b2p, b3p, bh, wv2p, bv2p]
    b_offs, c = [], 0
    for p in b_parts:
        b_offs.append(c)
        c += _rup(p.shape[1], 128)
    bslab = jnp.zeros((1, c), jnp.float32)
    for p, o in zip(b_parts, b_offs):
        bslab = bslab.at[:, o:o + p.shape[1]].set(p)

    kp = dict(w1=w1p, wslab=wslab.astype(compute_dtype), bslab=bslab)
    meta = dict(state_dim=sd, h1=h1p, h2=h2p, h3=h3p, head_pad=head_pad,
                num_brokers=nb, logits_off=off,
                w_offs=tuple(w_offs), b_offs=tuple(b_offs))
    return kp, meta


def reference_forward(x, raw, eps=1e-5):
    """Pure-JAX reference of the original (unfused) eval-mode forward."""
    h = x
    for i in (1, 2, 3):
        h = jnp.maximum(h @ raw[f"w{i}"] + raw[f"b{i}"], 0.0)
        scale = raw[f"gamma{i}"] * jax.lax.rsqrt(raw[f"rv{i}"] + eps)
        shift = raw[f"beta{i}"] - raw[f"rm{i}"] * scale
        h = h * scale + shift          # Dropout(0.1) eval mode = identity
    logits = h @ raw["wa"] + raw["ba"]
    v = jnp.maximum(h @ raw["wv1"] + raw["bv1"], 0.0)
    value = v @ raw["wv2"] + raw["bv2"]
    return logits, value


# --------------------------------- main ---------------------------------------


if __name__ == "__main__":
    state_dim = 32
    num_brokers = 8
    batch = 64

    key = jax.random.PRNGKey(0)
    k_params, k_x = jax.random.split(key)

    raw = init_params(k_params, state_dim, num_brokers)
    x = jax.random.normal(k_x, (batch, state_dim), jnp.float32)

    ref_logits, ref_value = reference_forward(x, raw)

    # f32-weight path: near bit-exact vs. the reference.
    kp32, meta32 = prepare_kernel_params(raw, compute_dtype=jnp.float32)
    fwd32 = jax.jit(lambda xx: routing_forward(xx, kp32, meta32))
    logits, value = jax.block_until_ready(fwd32(x))
    assert logits.shape == (batch, num_brokers)
    assert value.shape == (batch, 1)
    assert jnp.allclose(logits, ref_logits, atol=1e-4, rtol=1e-4)
    assert jnp.allclose(value, ref_value, atol=1e-4, rtol=1e-4)

    # production default: bf16 MXU operands (layer 1 / epilogue stay f32), f32 accumulate.
    kp16, meta16 = prepare_kernel_params(raw)   # compute_dtype=jnp.bfloat16 default
    fwd16 = jax.jit(lambda xx: routing_forward(xx, kp16, meta16))
    l16, v16 = jax.block_until_ready(fwd16(x))
    assert jnp.allclose(l16, ref_logits, atol=5e-2, rtol=5e-2)
    assert jnp.allclose(v16, ref_value, atol=5e-2, rtol=5e-2)

    print("KERNEL_OK")
</pallas_src>

<mosaic_0001>
module attributes {stable_mosaic.version = 11 : i64} {
  func.func @kernel(%arg0: i32, %arg1: memref<64x32xf32, #tpu.memory_space<vmem>>, %arg2: memref<32x256xf32, #tpu.memory_space<vmem>>, %arg3: memref<256x384xf32, #tpu.memory_space<vmem>>, %arg4: memref<1x896xf32, #tpu.memory_space<vmem>>, %arg5: memref<64x128xf32, #tpu.memory_space<vmem>>) attributes {dimension_semantics = [#tpu.dimension_semantics<parallel>], iteration_bounds = array<i64: 1>, scalar_prefetch = 0 : i64, scratch_operands = 0 : i64, tpu.core_type = #tpu.core_type<tc>, window_params = [{transform_indices = @transform_0, window_bounds = array<i64: 64, 32>}, {pipeline_mode = #tpu.pipeline_mode<synchronous>, transform_indices = @transform_1, window_bounds = array<i64: 32, 256>}, {pipeline_mode = #tpu.pipeline_mode<synchronous>, transform_indices = @transform_2, window_bounds = array<i64: 256, 384>}, {pipeline_mode = #tpu.pipeline_mode<synchronous>, transform_indices = @transform_3, window_bounds = array<i64: 1, 896>}, {transform_indices = @transform_4, window_bounds = array<i64: 64, 128>}]} {
    %c0 = arith.constant 0 : index
    %c0_0 = arith.constant 0 : index
    %0 = vector.load %arg1[%c0, %c0_0] : memref<64x32xf32, #tpu.memory_space<vmem>>, vector<64x32xf32>
    %c0_1 = arith.constant 0 : index
    %c0_2 = arith.constant 0 : index
    %1 = vector.load %arg2[%c0_1, %c0_2] : memref<32x256xf32, #tpu.memory_space<vmem>>, vector<32x256xf32>
    %cst = arith.constant dense<0.000000e+00> : vector<64x256xf32>
    %2 = tpu.matmul %0, %1, %cst {dimension_numbers = #tpu.dot_dimension_numbers<[1], [0], [0], [1], [0, 0, 1, 1], [], []>} : vector<64x32xf32>, vector<32x256xf32>, vector<64x256xf32> -> vector<64x256xf32>
    %c0_3 = arith.constant 0 : index
    %c0_4 = arith.constant 0 : index
    %3 = vector.load %arg4[%c0_3, %c0_4] : memref<1x896xf32, #tpu.memory_space<vmem>>, vector<1x256xf32>
    %4 = vector.broadcast %3 : vector<1x256xf32> to vector<64x256xf32>
    %5 = arith.addf %2, %4 : vector<64x256xf32>
    %cst_5 = arith.constant 0.000000e+00 : f32
    %6 = vector.broadcast %cst_5 : f32 to vector<64x256xf32>
    %7 = arith.maximumf %5, %6 : vector<64x256xf32>
    %c0_6 = arith.constant 0 : index
    %c0_7 = arith.constant 0 : index
    %8 = vector.load %arg3[%c0_6, %c0_7] : memref<256x384xf32, #tpu.memory_space<vmem>>, vector<256x128xf32>
    %cst_8 = arith.constant dense<0.000000e+00> : vector<64x128xf32>
    %9 = tpu.matmul %7, %8, %cst_8 {dimension_numbers = #tpu.dot_dimension_numbers<[1], [0], [0], [1], [0, 0, 1, 1], [], []>} : vector<64x256xf32>, vector<256x128xf32>, vector<64x128xf32> -> vector<64x128xf32>
    %c0_9 = arith.constant 0 : index
    %c256 = arith.constant 256 : index
    %10 = vector.load %arg4[%c0_9, %c256] : memref<1x896xf32, #tpu.memory_space<vmem>>, vector<1x128xf32>
    %11 = vector.broadcast %10 : vector<1x128xf32> to vector<64x128xf32>
    %12 = arith.addf %9, %11 : vector<64x128xf32>
    %cst_10 = arith.constant 0.000000e+00 : f32
    %13 = vector.broadcast %cst_10 : f32 to vector<64x128xf32>
    %14 = arith.maximumf %12, %13 : vector<64x128xf32>
    %c0_11 = arith.constant 0 : index
    %c128 = arith.constant 128 : index
    %15 = vector.load %arg3[%c0_11, %c128] : memref<256x384xf32, #tpu.memory_space<vmem>>, vector<128x128xf32>
    %cst_12 = arith.constant dense<0.000000e+00> : vector<64x128xf32>
    %16 = tpu.matmul %14, %15, %cst_12 {dimension_numbers = #tpu.dot_dimension_numbers<[1], [0], [0], [1], [0, 0, 1, 1], [], []>} : vector<64x128xf32>, vector<128x128xf32>, vector<64x128xf32> -> vector<64x128xf32>
    %c0_13 = arith.constant 0 : index
    %c384 = arith.constant 384 : index
    %17 = vector.load %arg4[%c0_13, %c384] : memref<1x896xf32, #tpu.memory_space<vmem>>, vector<1x128xf32>
    %18 = vector.broadcast %17 : vector<1x128xf32> to vector<64x128xf32>
    %19 = arith.addf %16, %18 : vector<64x128xf32>
    %cst_14 = arith.constant 0.000000e+00 : f32
    %20 = vector.broadcast %cst_14 : f32 to vector<64x128xf32>
    %21 = arith.maximumf %19, %20 : vector<64x128xf32>
    %c0_15 = arith.constant 0 : index
    %c256_16 = arith.constant 256 : index
    %22 = vector.load %arg3[%c0_15, %c256_16] : memref<256x384xf32, #tpu.memory_space<vmem>>, vector<128x128xf32>
    %cst_17 = arith.constant dense<0.000000e+00> : vector<64x128xf32>
    %23 = tpu.matmul %21, %22, %cst_17 {dimension_numbers = #tpu.dot_dimension_numbers<[1], [0], [0], [1], [0, 0, 1, 1], [], []>} : vector<64x128xf32>, vector<128x128xf32>, vector<64x128xf32> -> vector<64x128xf32>
    %c0_18 = arith.constant 0 : index
    %c512 = arith.constant 512 : index
    %24 = vector.load %arg4[%c0_18, %c512] : memref<1x896xf32, #tpu.memory_space<vmem>>, vector<1x128xf32>
    %25 = vector.broadcast %24 : vector<1x128xf32> to vector<64x128xf32>
    %26 = arith.addf %23, %25 : vector<64x128xf32>
    %cst_19 = arith.constant 0.000000e+00 : f32
    %27 = vector.broadcast %cst_19 : f32 to vector<64x128xf32>
    %28 = arith.maximumf %26, %27 : vector<64x128xf32>
    %c0_20 = arith.constant 0 : index
    %c640 = arith.constant 640 : index
    %29 = vector.load %arg4[%c0_20, %c640] : memref<1x896xf32, #tpu.memory_space<vmem>>, vector<1x128xf32>
    %30 = vector.broadcast %29 : vector<1x128xf32> to vector<64x128xf32>
    %31 = arith.mulf %28, %30 : vector<64x128xf32>
    %cst_21 = arith.constant dense<0.000000e+00> : vector<64xf32>
    %32 = vector.multi_reduction <add>, %31, %cst_21 [1] : vector<64x128xf32> to vector<64xf32>
    %33 = vector.shape_cast %32 : vector<64xf32> to vector<64x1xf32>
    %c0_22 = arith.constant 0 : index
    %c768 = arith.constant 768 : index
    %34 = vector.load %arg4[%c0_22, %c768] : memref<1x896xf32, #tpu.memory_space<vmem>>, vector<1x1xf32>
    %35 = vector.broadcast %34 : vector<1x1xf32> to vector<64x1xf32>
    %36 = arith.addf %33, %35 : vector<64x1xf32>
    %c0_23 = arith.constant 0 : index
    %c0_24 = arith.constant 0 : index
    %37 = vector.load %arg5[%c0_23, %c0_24] : memref<64x128xf32, #tpu.memory_space<vmem>>, vector<64x128xf32>
    tpu.vector_store %arg5[%c0_23, %c0_24], %26 {strides = array<i32>} : memref<64x128xf32, #tpu.memory_space<vmem>>, vector<64x128xf32>,
    %c0_25 = arith.constant 0 : index
    %c127 = arith.constant 127 : index
    %38 = vector.load %arg5[%c0_25, %c127] : memref<64x128xf32, #tpu.memory_space<vmem>>, vector<64x1xf32>
    tpu.vector_store %arg5[%c0_25, %c127], %36 {strides = array<i32>} : memref<64x128xf32, #tpu.memory_space<vmem>>, vector<64x1xf32>,
    return
  }
  func.func @transform_0(%arg0: i32) -> (i32, i32) {
    %c0_i32 = arith.constant 0 : i32
    %c0_i32_0 = arith.constant 0 : i32
    return %arg0, %c0_i32 : i32, i32
  }
  func.func @transform_1(%arg0: i32) -> (i32, i32) {
    %c0_i32 = arith.constant 0 : i32
    %c0_i32_0 = arith.constant 0 : i32
    %c0_i32_1 = arith.constant 0 : i32
    return %c0_i32, %c0_i32_0 : i32, i32
  }
  func.func @transform_2(%arg0: i32) -> (i32, i32) {
    %c0_i32 = arith.constant 0 : i32
    %c0_i32_0 = arith.constant 0 : i32
    %c0_i32_1 = arith.constant 0 : i32
    return %c0_i32, %c0_i32_0 : i32, i32
  }
  func.func @transform_3(%arg0: i32) -> (i32, i32) {
    %c0_i32 = arith.constant 0 : i32
    %c0_i32_0 = arith.constant 0 : i32
    %c0_i32_1 = arith.constant 0 : i32
    return %c0_i32, %c0_i32_0 : i32, i32
  }
  func.func @transform_4(%arg0: i32) -> (i32, i32) {
    %c0_i32 = arith.constant 0 : i32
    %c0_i32_0 = arith.constant 0 : i32
    return %arg0, %c0_i32 : i32, i32
  }
}

</mosaic_0001>

<llo_original>
// kernel: _lambda_.1
$region0: #{_lambda_.1}
  #allocation0 [shape = 'u32[]', space=smem, size = 0x4, offset = 0x4, fixed_abs, tag = 'smem constant byte address 0x4 - core index']
  #allocation1 [shape = 'u32[144,128]{1,0:T(1,128)}', space=vmem, size = 0x12000, scoped, tag = 'internal scratch']
  %s0 = inlined_call_operand.vmem [shape: f32[64,32], index: 0, kind: input, shape index: {}]
  %s1 = inlined_call_operand.vmem [shape: f32[32,256], index: 1, kind: input, shape index: {}]
  %s2 = inlined_call_operand.hbm [shape: f32[256,384], index: 2, kind: input, shape index: {}]
  %s3 = inlined_call_operand.vmem [shape: f32[1,896], index: 3, kind: input, shape index: {}]
  %s4 = inlined_call_operand.vmem [shape: f32[64,128], index: 4, kind: output, shape index: {}]
  %s5 = sld [smem:[#allocation0]]
  $region30: #{_lambda_.1} parent=0
    _
  %s7 = ssub.s32 1, %s5
  %s8 = scalar_select 0, %s7, %s5
  $region1: #{_lambda_.1} parent=0
    #allocation2 [shape = 'u8[393216]{0}', space=vmem, size = 0x60000, scoped, tag = 'input window, operand 2, single buffered']
    #allocation3 [shape = 's32[1]{0}', space=sflag, size = 0x4, scoped, tag = 'scoped memory for _lambda_.1']
    %9 = vsyncpa [#allocation3], 0
    // Predicated region
    $region2: #{_lambda_.1} parent=1 // pred_check
      _
    $region3: #{_lambda_.1} parent=1 // pred_check_branch
      %11 = sbr.rel (0) target = $region5
    $region4: #{_lambda_.1} parent=1 // pred_region
      _
    $region5: #{_lambda_.1} parent=1 // pred_fallthru
      _
    // Predicated region
    $region6: #{_lambda_.1} parent=1 // pred_check
      _
    $region7: #{_lambda_.1} parent=1 // pred_check_branch
      %13 = sbr.rel (0) target = $region9
    $region8: #{_lambda_.1} parent=1 // pred_region
      _
    $region9: #{_lambda_.1} parent=1 // pred_fallthru
      _
    // Predicated region
    $region10: #{_lambda_.1} parent=1 // pred_check
      _
    $region11: #{_lambda_.1} parent=1 // pred_check_branch
      %15 = sbr.rel (0) target = $region13
    $region12: #{_lambda_.1} parent=1 // pred_region
      %s17 = ssub.s32 12288, 12288
      %18 = vsyncadd [#allocation3], %s17
      %s19 = sshll.u32 [#allocation2], 4
      %s20 = int_to_ptr.vmem [resolvable:$true] %s19
      %25 = dma.hbm_to_vmem [thread:$0]  %s2, 12288, %s20, [#allocation3], 384, 384, 24
    $region13: #{_lambda_.1} parent=1 // pred_fallthru
      _
    // Predicated region
    $region14: #{_lambda_.1} parent=1 // pred_check
      _
    $region15: #{_lambda_.1} parent=1 // pred_check_branch
      %27 = sbr.rel (0) target = $region17
    $region16: #{_lambda_.1} parent=1 // pred_region
      _
    $region17: #{_lambda_.1} parent=1 // pred_fallthru
      _
    // Predicated region
    $region18: #{_lambda_.1} parent=1 // pred_check
      _
    $region19: #{_lambda_.1} parent=1 // pred_check_branch
      %29 = sbr.rel (0) target = $region21
    $region20: #{_lambda_.1} parent=1 // pred_region
      %30 = dma.done [#allocation3], 12288
    $region21: #{_lambda_.1} parent=1 // pred_fallthru
      _
    %v31 = vld [vmem:[%s0] sm:$0xff]
    %v32 = vld [vmem:[%s0 + $0x8] sm:$0xff]
    %v33 = vld [vmem:[%s0 + $0x10] sm:$0xff]
    %v34 = vld [vmem:[%s0 + $0x18] sm:$0xff]
    %v35 = vld [vmem:[%s0 + $0x20] sm:$0xff]
    %v36 = vld [vmem:[%s0 + $0x28] sm:$0xff]
    %v37 = vld [vmem:[%s0 + $0x30] sm:$0xff]
    %v38 = vld [vmem:[%s0 + $0x38] sm:$0xff]
    %v39 = vld [vmem:[%s1] sm:$0xff]
    %v40 = vld [vmem:[%s1 + $0x8] sm:$0xff]
    %v41 = vld [vmem:[%s1 + $0x10] sm:$0xff]
    %v42 = vld [vmem:[%s1 + $0x18] sm:$0xff]
    %v43 = vld [vmem:[%s1 + $0x20] sm:$0xff]
    %v44 = vld [vmem:[%s1 + $0x28] sm:$0xff]
    %v45 = vld [vmem:[%s1 + $0x30] sm:$0xff]
    %v46 = vld [vmem:[%s1 + $0x38] sm:$0xff]
    %v47 = vld [vmem:[%s3] sm:$0x3]
    %v49 = vlaneseq
    %v50 = vshrl.u32 %v49, 7
    %v51 = vsub.s32 0, %v50
    %v52 = vrot.slane %v47, %v51
    %v53 = vlaneseq
    %v54 = vshrl.u32 %v53, 7
    %v55 = vsub.s32 1, %v54
    %v56 = vrot.slane %v47, %v55
    %vm59 = vcmask 261120
    %v61 = vsel %vm59, %v31, 0
    %v64 = vsel %vm59, %v32, 0
    %v67 = vsel %vm59, %v33, 0
    %v70 = vsel %vm59, %v34, 0
    %v73 = vsel %vm59, %v35, 0
    %v76 = vsel %vm59, %v36, 0
    %v79 = vsel %vm59, %v37, 0
    %v82 = vsel %vm59, %v38, 0
    %84 = vmatprep.subr.mxu0 0.0
    %85 = vmatpush1.msra.mxu0 0.0
    %86 = vmatprep.subr.mxu0 0.0
    %87 = vmatpush1.msra.mxu0 0.0
    %88 = vmatprep.subr.mxu0 0.0
    %89 = vmatpush1.msra.mxu0 0.0
    %90 = vmatprep.subr.mxu0 0.0
    %91 = vmatpush1.msra.mxu0 0.0
    %92 = vmatprep.subr.mxu0 0.0
    %93 = vmatpush1.msra.mxu0 0.0
    %94 = vmatprep.subr.mxu0 0.0
    %95 = vmatpush1.msra.mxu0 0.0
    %96 = vmatprep.subr.mxu0 0.0
    %97 = vmatpush1.msra.mxu0 0.0
    %98 = vmatprep.subr.mxu0 0.0
    %99 = vmatpush1.msra.mxu0 0.0
    %100 = vmatprep.subr.mxu0 0.0
    %101 = vmatpush1.msra.mxu0 0.0
    %102 = vmatprep.subr.mxu0 0.0
    %103 = vmatpush1.msra.mxu0 0.0
    %104 = vmatprep.subr.mxu0 0.0
    %105 = vmatpush1.msra.mxu0 0.0
    %106 = vmatprep.subr.mxu0 0.0
    %107 = vmatpush1.msra.mxu0 0.0
    %108 = vmatprep.subr.mxu0 %v46
    %109 = vmatpush1.msra.mxu0 %v45
    %110 = vmatprep.subr.mxu0 %v44
    %111 = vmatpush1.msra.mxu0 %v43
    %112 = vmatprep.subr.mxu0 %v42
    %113 = vmatpush1.msra.mxu0 %v41
    %114 = vmatprep.subr.mxu0 %v40
    %115 = vmatpush1.msra.mxu0 %v39
    %116 = vmatprep.subr.mxu0 0.0
    %117 = vmatpush2.msra.mxu0 0.0
    %118 = vmatprep.subr.mxu0 0.0
    %119 = vmatpush2.msra.mxu0 0.0
    %120 = vmatprep.subr.mxu0 0.0
    %121 = vmatpush2.msra.mxu0 0.0
    %122 = vmatprep.subr.mxu0 0.0
    %123 = vmatpush2.msra.mxu0 0.0
    %124 = vmatprep.subr.mxu0 0.0
    %125 = vmatpush2.msra.mxu0 0.0
    %126 = vmatprep.subr.mxu0 0.0
    %127 = vmatpush2.msra.mxu0 0.0
    %128 = vmatprep.subr.mxu0 0.0
    %129 = vmatpush2.msra.mxu0 0.0
    %130 = vmatprep.subr.mxu0 0.0
    %131 = vmatpush2.msra.mxu0 0.0
    %132 = vmatprep.subr.mxu0 0.0
    %133 = vmatpush2.msra.mxu0 0.0
    %134 = vmatprep.subr.mxu0 0.0
    %135 = vmatpush2.msra.mxu0 0.0
    %136 = vmatprep.subr.mxu0 0.0
    %137 = vmatpush2.msra.mxu0 0.0
    %138 = vmatprep.subr.mxu0 0.0
    %139 = vmatpush2.msra.mxu0 0.0
    %140 = vmatprep.subr.mxu0 0.0
    %141 = vmatpush2.msra.mxu0 0.0
    %142 = vmatprep.subr.mxu0 0.0
    %143 = vmatpush2.msra.mxu0 0.0
    %144 = vmatprep.subr.mxu0 0.0
    %145 = vmatpush2.msra.mxu0 0.0
    %146 = vmatprep.subr.mxu0 0.0
    %147 = vmatpush2.msra.mxu0 0.0
    %148 = vmatprep.mubr.f32.mxu0 0.0
    %149 = vmatmul.mubr.f32.gmra.mxu0 %v61
    %v150 = vpop.f32.mrf.mxu0
    %v151 = vadd.f32 %v52, %v150
    %v152 = vpop.f32.mrf.mxu0
    %v153 = vadd.f32 %v56, %v152
    %154 = vmatprep.mubr.f32.mxu0 0.0
    %155 = vmatmul.mubr.f32.gmra.mxu0 %v64
    %v156 = vpop.f32.mrf.mxu0
    %v157 = vadd.f32 %v52, %v156
    %v158 = vpop.f32.mrf.mxu0
    %v159 = vadd.f32 %v56, %v158
    %160 = vmatprep.mubr.f32.mxu0 0.0
    %161 = vmatmul.mubr.f32.gmra.mxu0 %v67
    %v162 = vpop.f32.mrf.mxu0
    %v163 = vadd.f32 %v52, %v162
    %v164 = vpop.f32.mrf.mxu0
    %v165 = vadd.f32 %v56, %v164
    %166 = vmatprep.mubr.f32.mxu0 0.0
    %167 = vmatmul.mubr.f32.gmra.mxu0 %v70
    %v168 = vpop.f32.mrf.mxu0
    %v169 = vadd.f32 %v52, %v168
    %v170 = vpop.f32.mrf.mxu0
    %v171 = vadd.f32 %v56, %v170
    %172 = vmatprep.mubr.f32.mxu0 0.0
    %173 = vmatmul.mubr.f32.gmra.mxu0 %v73
    %v174 = vpop.f32.mrf.mxu0
    %v175 = vadd.f32 %v52, %v174
    %v176 = vpop.f32.mrf.mxu0
    %v177 = vadd.f32 %v56, %v176
    %178 = vmatprep.mubr.f32.mxu0 0.0
    %179 = vmatmul.mubr.f32.gmra.mxu0 %v76
    %v180 = vpop.f32.mrf.mxu0
    %v181 = vadd.f32 %v52, %v180
    %v182 = vpop.f32.mrf.mxu0
    %v183 = vadd.f32 %v56, %v182
    %184 = vmatprep.mubr.f32.mxu0 0.0
    %185 = vmatmul.mubr.f32.gmra.mxu0 %v79
    %v186 = vpop.f32.mrf.mxu0
    %v187 = vadd.f32 %v52, %v186
    %v188 = vpop.f32.mrf.mxu0
    %v189 = vadd.f32 %v56, %v188
    %190 = vmatprep.mubr.f32.mxu0 0.0
    %191 = vmatmul.mubr.f32.gmra.mxu0 %v82
    %v192 = vpop.f32.mrf.mxu0
    %v193 = vadd.f32 %v52, %v192
    %v194 = vpop.f32.mrf.mxu0
    %v195 = vadd.f32 %v56, %v194
    %196 = vdwg.mxu0
    %v197 = vmax.f32 %v151, 0.0
    %v198 = vmax.f32 %v153, 0.0
    %v199 = vmax.f32 %v157, 0.0
    %v200 = vmax.f32 %v159, 0.0
    %v201 = vmax.f32 %v163, 0.0
    %v202 = vmax.f32 %v165, 0.0
    %v203 = vmax.f32 %v169, 0.0
    %v204 = vmax.f32 %v171, 0.0
    %v205 = vmax.f32 %v175, 0.0
    %v206 = vmax.f32 %v177, 0.0
    %v207 = vmax.f32 %v181, 0.0
    %v208 = vmax.f32 %v183, 0.0
    %v209 = vmax.f32 %v187, 0.0
    %v210 = vmax.f32 %v189, 0.0
    %v211 = vmax.f32 %v193, 0.0
    %v212 = vmax.f32 %v195, 0.0
    %v213 = vld [vmem:[#allocation2] sm:$0xff]
    %v214 = vld [vmem:[#allocation2 + $0x18] sm:$0xff]
    %v215 = vld [vmem:[#allocation2 + $0x30] sm:$0xff]
    %v216 = vld [vmem:[#allocation2 + $0x48] sm:$0xff]
    %v217 = vld [vmem:[#allocation2 + $0x60] sm:$0xff]
    %v218 = vld [vmem:[#allocation2 + $0x78] sm:$0xff]
    %v219 = vld [vmem:[#allocation2 + $0x90] sm:$0xff]
    %v220 = vld [vmem:[#allocation2 + $0xa8] sm:$0xff]
    %v221 = vld [vmem:[#allocation2 + $0xc0] sm:$0xff]
    %v222 = vld [vmem:[#allocation2 + $0xd8] sm:$0xff]
    %v223 = vld [vmem:[#allocation2 + $0xf0] sm:$0xff]
    %v224 = vld [vmem:[#allocation2 + $0x108] sm:$0xff]
    %v225 = vld [vmem:[#allocation2 + $0x120] sm:$0xff]
    %v226 = vld [vmem:[#allocation2 + $0x138] sm:$0xff]
    %v227 = vld [vmem:[#allocation2 + $0x150] sm:$0xff]
    %v228 = vld [vmem:[#allocation2 + $0x168] sm:$0xff]
    %v229 = vld [vmem:[#allocation2 + $0x180] sm:$0xff]
    %v230 = vld [vmem:[#allocation2 + $0x198] sm:$0xff]
    %v231 = vld [vmem:[#allocation2 + $0x1b0] sm:$0xff]
    %v232 = vld [vmem:[#allocation2 + $0x1c8] sm:$0xff]
    %v233 = vld [vmem:[#allocation2 + $0x1e0] sm:$0xff]
    %v234 = vld [vmem:[#allocation2 + $0x1f8] sm:$0xff]
    %v235 = vld [vmem:[#allocation2 + $0x210] sm:$0xff]
    %v236 = vld [vmem:[#allocation2 + $0x228] sm:$0xff]
    %v237 = vld [vmem:[#allocation2 + $0x240] sm:$0xff]
    %v238 = vld [vmem:[#allocation2 + $0x258] sm:$0xff]
    %v239 = vld [vmem:[#allocation2 + $0x270] sm:$0xff]
    %v240 = vld [vmem:[#allocation2 + $0x288] sm:$0xff]
    %v241 = vld [vmem:[#allocation2 + $0x2a0] sm:$0xff]
    %v242 = vld [vmem:[#allocation2 + $0x2b8] sm:$0xff]
    %v243 = vld [vmem:[#allocation2 + $0x2d0] sm:$0xff]
    %v244 = vld [vmem:[#allocation2 + $0x2e8] sm:$0xff]
    %v245 = vld [vmem:[%s3 + $0x2] sm:$0x1]
    %v247 = vlaneseq
    %v248 = vshrl.u32 %v247, 7
    %v249 = vsub.s32 0, %v248
    %v250 = vrot.slane %v245, %v249
    %252 = vmatprep.subr.mxu0 0.0
    %253 = vmatpush1.msra.mxu0 %v228
    %254 = vmatprep.subr.mxu0 0.0
    %255 = vmatpush1.msra.mxu0 %v227
    %256 = vmatprep.subr.mxu0 0.0
    %257 = vmatpush1.msra.mxu0 %v226
    %258 = vmatprep.subr.mxu0 0.0
    %259 = vmatpush1.msra.mxu0 %v225
    %260 = vmatprep.subr.mxu0 0.0
    %261 = vmatpush1.msra.mxu0 %v224
    %262 = vmatprep.subr.mxu0 0.0
    %263 = vmatpush1.msra.mxu0 %v223
    %264 = vmatprep.subr.mxu0 0.0
    %265 = vmatpush1.msra.mxu0 %v222
    %266 = vmatprep.subr.mxu0 0.0
    %267 = vmatpush1.msra.mxu0 %v221
    %268 = vmatprep.subr.mxu0 0.0
    %269 = vmatpush1.msra.mxu0 %v220
    %270 = vmatprep.subr.mxu0 0.0
    %271 = vmatpush1.msra.mxu0 %v219
    %272 = vmatprep.subr.mxu0 0.0
    %273 = vmatpush1.msra.mxu0 %v218
    %274 = vmatprep.subr.mxu0 0.0
    %275 = vmatpush1.msra.mxu0 %v217
    %276 = vmatprep.subr.mxu0 0.0
    %277 = vmatpush1.msra.mxu0 %v216
    %278 = vmatprep.subr.mxu0 0.0
    %279 = vmatpush1.msra.mxu0 %v215
    %280 = vmatprep.subr.mxu0 0.0
    %281 = vmatpush1.msra.mxu0 %v214
    %282 = vmatprep.subr.mxu0 0.0
    %283 = vmatpush1.msra.mxu0 %v213
    %284 = vmatprep.subr.mxu0 0.0
    %285 = vmatpush2.msra.mxu0 %v244
    %286 = vmatprep.subr.mxu0 0.0
    %287 = vmatpush2.msra.mxu0 %v243
    %288 = vmatprep.subr.mxu0 0.0
    %289 = vmatpush2.msra.mxu0 %v242
    %290 = vmatprep.subr.mxu0 0.0
    %291 = vmatpush2.msra.mxu0 %v241
    %292 = vmatprep.subr.mxu0 0.0
    %293 = vmatpush2.msra.mxu0 %v240
    %294 = vmatprep.subr.mxu0 0.0
    %295 = vmatpush2.msra.mxu0 %v239
    %296 = vmatprep.subr.mxu0 0.0
    %297 = vmatpush2.msra.mxu0 %v238
    %298 = vmatprep.subr.mxu0 0.0
    %299 = vmatpush2.msra.mxu0 %v237
    %300 = vmatprep.subr.mxu0 0.0
    %301 = vmatpush2.msra.mxu0 %v236
    %302 = vmatprep.subr.mxu0 0.0
    %303 = vmatpush2.msra.mxu0 %v235
    %304 = vmatprep.subr.mxu0 0.0
    %305 = vmatpush2.msra.mxu0 %v234
    %306 = vmatprep.subr.mxu0 0.0
    %307 = vmatpush2.msra.mxu0 %v233
    %308 = vmatprep.subr.mxu0 0.0
    %309 = vmatpush2.msra.mxu0 %v232
    %310 = vmatprep.subr.mxu0 0.0
    %311 = vmatpush2.msra.mxu0 %v231
    %312 = vmatprep.subr.mxu0 0.0
    %313 = vmatpush2.msra.mxu0 %v230
    %314 = vmatprep.subr.mxu0 0.0
    %315 = vmatpush2.msra.mxu0 %v229
    %316 = vmatprep.mubr.f32.mxu0 %v198
    %317 = vmatmul.mubr.f32.gmra.mxu0 %v197
    %v318 = vpop.f32.mrf.mxu0
    %v319 = vadd.f32 %v250, %v318
    %v320 = vpop.f32.mrf.mxu0
    %321 = vmatprep.mubr.f32.mxu0 %v200
    %322 = vmatmul.mubr.f32.gmra.mxu0 %v199
    %v323 = vpop.f32.mrf.mxu0
    %v324 = vadd.f32 %v250, %v323
    %v325 = vpop.f32.mrf.mxu0
    %326 = vmatprep.mubr.f32.mxu0 %v202
    %327 = vmatmul.mubr.f32.gmra.mxu0 %v201
    %v328 = vpop.f32.mrf.mxu0
    %v329 = vadd.f32 %v250, %v328
    %v330 = vpop.f32.mrf.mxu0
    %331 = vmatprep.mubr.f32.mxu0 %v204
    %332 = vmatmul.mubr.f32.gmra.mxu0 %v203
    %v333 = vpop.f32.mrf.mxu0
    %v334 = vadd.f32 %v250, %v333
    %v335 = vpop.f32.mrf.mxu0
    %336 = vmatprep.mubr.f32.mxu0 %v206
    %337 = vmatmul.mubr.f32.gmra.mxu0 %v205
    %v338 = vpop.f32.mrf.mxu0
    %v339 = vadd.f32 %v250, %v338
    %v340 = vpop.f32.mrf.mxu0
    %341 = vmatprep.mubr.f32.mxu0 %v208
    %342 = vmatmul.mubr.f32.gmra.mxu0 %v207
    %v343 = vpop.f32.mrf.mxu0
    %v344 = vadd.f32 %v250, %v343
    %v345 = vpop.f32.mrf.mxu0
    %346 = vmatprep.mubr.f32.mxu0 %v210
    %347 = vmatmul.mubr.f32.gmra.mxu0 %v209
    %v348 = vpop.f32.mrf.mxu0
    %v349 = vadd.f32 %v250, %v348
    %v350 = vpop.f32.mrf.mxu0
    %351 = vmatprep.mubr.f32.mxu0 %v212
    %352 = vmatmul.mubr.f32.gmra.mxu0 %v211
    %v353 = vpop.f32.mrf.mxu0
    %v354 = vadd.f32 %v250, %v353
    %v355 = vpop.f32.mrf.mxu0
    %356 = vdwg.mxu0
    %v357 = vmax.f32 %v319, 0.0
    %v358 = vmax.f32 %v324, 0.0
    %v359 = vmax.f32 %v329, 0.0
    %v360 = vmax.f32 %v334, 0.0
    %v361 = vmax.f32 %v339, 0.0
    %v362 = vmax.f32 %v344, 0.0
    %v363 = vmax.f32 %v349, 0.0
    %v364 = vmax.f32 %v354, 0.0
    %v365 = vld [vmem:[#allocation2 + $0x8] sm:$0xff]
    %v366 = vld [vmem:[#allocation2 + $0x20] sm:$0xff]
    %v367 = vld [vmem:[#allocation2 + $0x38] sm:$0xff]
    %v368 = vld [vmem:[#allocation2 + $0x50] sm:$0xff]
    %v369 = vld [vmem:[#allocation2 + $0x68] sm:$0xff]
    %v370 = vld [vmem:[#allocation2 + $0x80] sm:$0xff]
    %v371 = vld [vmem:[#allocation2 + $0x98] sm:$0xff]
    %v372 = vld [vmem:[#allocation2 + $0xb0] sm:$0xff]
    %v373 = vld [vmem:[#allocation2 + $0xc8] sm:$0xff]
    %v374 = vld [vmem:[#allocation2 + $0xe0] sm:$0xff]
    %v375 = vld [vmem:[#allocation2 + $0xf8] sm:$0xff]
    %v376 = vld [vmem:[#allocation2 + $0x110] sm:$0xff]
    %v377 = vld [vmem:[#allocation2 + $0x128] sm:$0xff]
    %v378 = vld [vmem:[#allocation2 + $0x140] sm:$0xff]
    %v379 = vld [vmem:[#allocation2 + $0x158] sm:$0xff]
    %v380 = vld [vmem:[#allocation2 + $0x170] sm:$0xff]
    %v381 = vld [vmem:[%s3 + $0x3] sm:$0x1]
    %v383 = vlaneseq
    %v384 = vshrl.u32 %v383, 7
    %v385 = vsub.s32 0, %v384
    %v386 = vrot.slane %v381, %v385
    %388 = vmatprep.subr.mxu0 0.0
    %389 = vmatpush1.msra.mxu0 %v380
    %390 = vmatprep.subr.mxu0 0.0
    %391 = vmatpush1.msra.mxu0 %v379
    %392 = vmatprep.subr.mxu0 0.0
    %393 = vmatpush1.msra.mxu0 %v378
    %394 = vmatprep.subr.mxu0 0.0
    %395 = vmatpush1.msra.mxu0 %v377
    %396 = vmatprep.subr.mxu0 0.0
    %397 = vmatpush1.msra.mxu0 %v376
    %398 = vmatprep.subr.mxu0 0.0
    %399 = vmatpush1.msra.mxu0 %v375
    %400 = vmatprep.subr.mxu0 0.0
    %401 = vmatpush1.msra.mxu0 %v374
    %402 = vmatprep.subr.mxu0 0.0
    %403 = vmatpush1.msra.mxu0 %v373
    %404 = vmatprep.subr.mxu0 0.0
    %405 = vmatpush1.msra.mxu0 %v372
    %406 = vmatprep.subr.mxu0 0.0
    %407 = vmatpush1.msra.mxu0 %v371
    %408 = vmatprep.subr.mxu0 0.0
    %409 = vmatpush1.msra.mxu0 %v370
    %410 = vmatprep.subr.mxu0 0.0
    %411 = vmatpush1.msra.mxu0 %v369
    %412 = vmatprep.subr.mxu0 0.0
    %413 = vmatpush1.msra.mxu0 %v368
    %414 = vmatprep.subr.mxu0 0.0
    %415 = vmatpush1.msra.mxu0 %v367
    %416 = vmatprep.subr.mxu0 0.0
    %417 = vmatpush1.msra.mxu0 %v366
    %418 = vmatprep.subr.mxu0 0.0
    %419 = vmatpush1.msra.mxu0 %v365
    %420 = vmatprep.subr.mxu0 0.0
    %421 = vmatpush2.msra.mxu0 0.0
    %422 = vmatprep.subr.mxu0 0.0
    %423 = vmatpush2.msra.mxu0 0.0
    %424 = vmatprep.subr.mxu0 0.0
    %425 = vmatpush2.msra.mxu0 0.0
    %426 = vmatprep.subr.mxu0 0.0
    %427 = vmatpush2.msra.mxu0 0.0
    %428 = vmatprep.subr.mxu0 0.0
    %429 = vmatpush2.msra.mxu0 0.0
    %430 = vmatprep.subr.mxu0 0.0
    %431 = vmatpush2.msra.mxu0 0.0
    %432 = vmatprep.subr.mxu0 0.0
    %433 = vmatpush2.msra.mxu0 0.0
    %434 = vmatprep.subr.mxu0 0.0
    %435 = vmatpush2.msra.mxu0 0.0
    %436 = vmatprep.subr.mxu0 0.0
    %437 = vmatpush2.msra.mxu0 0.0
    %438 = vmatprep.subr.mxu0 0.0
    %439 = vmatpush2.msra.mxu0 0.0
    %440 = vmatprep.subr.mxu0 0.0
    %441 = vmatpush2.msra.mxu0 0.0
    %442 = vmatprep.subr.mxu0 0.0
    %443 = vmatpush2.msra.mxu0 0.0
    %444 = vmatprep.subr.mxu0 0.0
    %445 = vmatpush2.msra.mxu0 0.0
    %446 = vmatprep.subr.mxu0 0.0
    %447 = vmatpush2.msra.mxu0 0.0
    %448 = vmatprep.subr.mxu0 0.0
    %449 = vmatpush2.msra.mxu0 0.0
    %450 = vmatprep.subr.mxu0 0.0
    %451 = vmatpush2.msra.mxu0 0.0
    %452 = vmatprep.mubr.f32.mxu0 0.0
    %453 = vmatmul.mubr.f32.gmra.mxu0 %v357
    %v454 = vpop.f32.mrf.mxu0
    %v455 = vadd.f32 %v386, %v454
    %v456 = vpop.f32.mrf.mxu0
    %457 = vmatprep.mubr.f32.mxu0 0.0
    %458 = vmatmul.mubr.f32.gmra.mxu0 %v358
    %v459 = vpop.f32.mrf.mxu0
    %v460 = vadd.f32 %v386, %v459
    %v461 = vpop.f32.mrf.mxu0
    %462 = vmatprep.mubr.f32.mxu0 0.0
    %463 = vmatmul.mubr.f32.gmra.mxu0 %v359
    %v464 = vpop.f32.mrf.mxu0
    %v465 = vadd.f32 %v386, %v464
    %v466 = vpop.f32.mrf.mxu0
    %467 = vmatprep.mubr.f32.mxu0 0.0
    %468 = vmatmul.mubr.f32.gmra.mxu0 %v360
    %v469 = vpop.f32.mrf.mxu0
    %v470 = vadd.f32 %v386, %v469
    %v471 = vpop.f32.mrf.mxu0
    %472 = vmatprep.mubr.f32.mxu0 0.0
    %473 = vmatmul.mubr.f32.gmra.mxu0 %v361
    %v474 = vpop.f32.mrf.mxu0
    %v475 = vadd.f32 %v386, %v474
    %v476 = vpop.f32.mrf.mxu0
    %477 = vmatprep.mubr.f32.mxu0 0.0
    %478 = vmatmul.mubr.f32.gmra.mxu0 %v362
    %v479 = vpop.f32.mrf.mxu0
    %v480 = vadd.f32 %v386, %v479
    %v481 = vpop.f32.mrf.mxu0
    %482 = vmatprep.mubr.f32.mxu0 0.0
    %483 = vmatmul.mubr.f32.gmra.mxu0 %v363
    %v484 = vpop.f32.mrf.mxu0
    %v485 = vadd.f32 %v386, %v484
    %v486 = vpop.f32.mrf.mxu0
    %487 = vmatprep.mubr.f32.mxu0 0.0
    %488 = vmatmul.mubr.f32.gmra.mxu0 %v364
    %v489 = vpop.f32.mrf.mxu0
    %v490 = vadd.f32 %v386, %v489
    %v491 = vpop.f32.mrf.mxu0
    %492 = vdwg.mxu0
    %v493 = vmax.f32 %v455, 0.0
    %v494 = vmax.f32 %v460, 0.0
    %v495 = vmax.f32 %v465, 0.0
    %v496 = vmax.f32 %v470, 0.0
    %v497 = vmax.f32 %v475, 0.0
    %v498 = vmax.f32 %v480, 0.0
    %v499 = vmax.f32 %v485, 0.0
    %v500 = vmax.f32 %v490, 0.0
    %v501 = vld [vmem:[#allocation2 + $0x10] sm:$0xff]
    %v502 = vld [vmem:[#allocation2 + $0x28] sm:$0xff]
    %v503 = vld [vmem:[#allocation2 + $0x40] sm:$0xff]
    %v504 = vld [vmem:[#allocation2 + $0x58] sm:$0xff]
    %v505 = vld [vmem:[#allocation2 + $0x70] sm:$0xff]
    %v506 = vld [vmem:[#allocation2 + $0x88] sm:$0xff]
    %v507 = vld [vmem:[#allocation2 + $0xa0] sm:$0xff]
    %v508 = vld [vmem:[#allocation2 + $0xb8] sm:$0xff]
    %v509 = vld [vmem:[#allocation2 + $0xd0] sm:$0xff]
    %v510 = vld [vmem:[#allocation2 + $0xe8] sm:$0xff]
    %v511 = vld [vmem:[#allocation2 + $0x100] sm:$0xff]
    %v512 = vld [vmem:[#allocation2 + $0x118] sm:$0xff]
    %v513 = vld [vmem:[#allocation2 + $0x130] sm:$0xff]
    %v514 = vld [vmem:[#allocation2 + $0x148] sm:$0xff]
    %v515 = vld [vmem:[#allocation2 + $0x160] sm:$0xff]
    %v516 = vld [vmem:[#allocation2 + $0x178] sm:$0xff]
    %v517 = vld [vmem:[%s3 + $0x4] sm:$0x1]
    %v519 = vlaneseq
    %v520 = vshrl.u32 %v519, 7
    %v521 = vsub.s32 0, %v520
    %v522 = vrot.slane %v517, %v521
    %524 = vmatprep.subr.mxu0 0.0
    %525 = vmatpush1.msra.mxu0 %v516
    %526 = vmatprep.subr.mxu0 0.0
    %527 = vmatpush1.msra.mxu0 %v515
    %528 = vmatprep.subr.mxu0 0.0
    %529 = vmatpush1.msra.mxu0 %v514
    %530 = vmatprep.subr.mxu0 0.0
    %531 = vmatpush1.msra.mxu0 %v513
    %532 = vmatprep.subr.mxu0 0.0
    %533 = vmatpush1.msra.mxu0 %v512
    %534 = vmatprep.subr.mxu0 0.0
    %535 = vmatpush1.msra.mxu0 %v511
    %536 = vmatprep.subr.mxu0 0.0
    %537 = vmatpush1.msra.mxu0 %v510
    %538 = vmatprep.subr.mxu0 0.0
    %539 = vmatpush1.msra.mxu0 %v509
    %540 = vmatprep.subr.mxu0 0.0
    %541 = vmatpush1.msra.mxu0 %v508
    %542 = vmatprep.subr.mxu0 0.0
    %543 = vmatpush1.msra.mxu0 %v507
    %544 = vmatprep.subr.mxu0 0.0
    %545 = vmatpush1.msra.mxu0 %v506
    %546 = vmatprep.subr.mxu0 0.0
    %547 = vmatpush1.msra.mxu0 %v505
    %548 = vmatprep.subr.mxu0 0.0
    %549 = vmatpush1.msra.mxu0 %v504
    %550 = vmatprep.subr.mxu0 0.0
    %551 = vmatpush1.msra.mxu0 %v503
    %552 = vmatprep.subr.mxu0 0.0
    %553 = vmatpush1.msra.mxu0 %v502
    %554 = vmatprep.subr.mxu0 0.0
    %555 = vmatpush1.msra.mxu0 %v501
    %556 = vmatprep.subr.mxu0 0.0
    %557 = vmatpush2.msra.mxu0 0.0
    %558 = vmatprep.subr.mxu0 0.0
    %559 = vmatpush2.msra.mxu0 0.0
    %560 = vmatprep.subr.mxu0 0.0
    %561 = vmatpush2.msra.mxu0 0.0
    %562 = vmatprep.subr.mxu0 0.0
    %563 = vmatpush2.msra.mxu0 0.0
    %564 = vmatprep.subr.mxu0 0.0
    %565 = vmatpush2.msra.mxu0 0.0
    %566 = vmatprep.subr.mxu0 0.0
    %567 = vmatpush2.msra.mxu0 0.0
    %568 = vmatprep.subr.mxu0 0.0
    %569 = vmatpush2.msra.mxu0 0.0
    %570 = vmatprep.subr.mxu0 0.0
    %571 = vmatpush2.msra.mxu0 0.0
    %572 = vmatprep.subr.mxu0 0.0
    %573 = vmatpush2.msra.mxu0 0.0
    %574 = vmatprep.subr.mxu0 0.0
    %575 = vmatpush2.msra.mxu0 0.0
    %576 = vmatprep.subr.mxu0 0.0
    %577 = vmatpush2.msra.mxu0 0.0
    %578 = vmatprep.subr.mxu0 0.0
    %579 = vmatpush2.msra.mxu0 0.0
    %580 = vmatprep.subr.mxu0 0.0
    %581 = vmatpush2.msra.mxu0 0.0
    %582 = vmatprep.subr.mxu0 0.0
    %583 = vmatpush2.msra.mxu0 0.0
    %584 = vmatprep.subr.mxu0 0.0
    %585 = vmatpush2.msra.mxu0 0.0
    %586 = vmatprep.subr.mxu0 0.0
    %587 = vmatpush2.msra.mxu0 0.0
    %588 = vmatprep.mubr.f32.mxu0 0.0
    %589 = vmatmul.mubr.f32.gmra.mxu0 %v493
    %v590 = vpop.f32.mrf.mxu0
    %v591 = vadd.f32 %v522, %v590
    %v592 = vpop.f32.mrf.mxu0
    %593 = vmatprep.mubr.f32.mxu0 0.0
    %594 = vmatmul.mubr.f32.gmra.mxu0 %v494
    %v595 = vpop.f32.mrf.mxu0
    %v596 = vadd.f32 %v522, %v595
    %v597 = vpop.f32.mrf.mxu0
    %598 = vmatprep.mubr.f32.mxu0 0.0
    %599 = vmatmul.mubr.f32.gmra.mxu0 %v495
    %v600 = vpop.f32.mrf.mxu0
    %v601 = vadd.f32 %v522, %v600
    %v602 = vpop.f32.mrf.mxu0
    %603 = vmatprep.mubr.f32.mxu0 0.0
    %604 = vmatmul.mubr.f32.gmra.mxu0 %v496
    %v605 = vpop.f32.mrf.mxu0
    %v606 = vadd.f32 %v522, %v605
    %v607 = vpop.f32.mrf.mxu0
    %608 = vmatprep.mubr.f32.mxu0 0.0
    %609 = vmatmul.mubr.f32.gmra.mxu0 %v497
    %v610 = vpop.f32.mrf.mxu0
    %v611 = vadd.f32 %v522, %v610
    %v612 = vpop.f32.mrf.mxu0
    %613 = vmatprep.mubr.f32.mxu0 0.0
    %614 = vmatmul.mubr.f32.gmra.mxu0 %v498
    %v615 = vpop.f32.mrf.mxu0
    %v616 = vadd.f32 %v522, %v615
    %v617 = vpop.f32.mrf.mxu0
    %618 = vmatprep.mubr.f32.mxu0 0.0
    %619 = vmatmul.mubr.f32.gmra.mxu0 %v499
    %v620 = vpop.f32.mrf.mxu0
    %v621 = vadd.f32 %v522, %v620
    %v622 = vpop.f32.mrf.mxu0
    %623 = vmatprep.mubr.f32.mxu0 0.0
    %624 = vmatmul.mubr.f32.gmra.mxu0 %v500
    %v625 = vpop.f32.mrf.mxu0
    %v626 = vadd.f32 %v522, %v625
    %v627 = vpop.f32.mrf.mxu0
    %628 = vdwg.mxu0
    %v629 = vmax.f32 %v591, 0.0
    %v630 = vmax.f32 %v596, 0.0
    %v631 = vmax.f32 %v601, 0.0
    %v632 = vmax.f32 %v606, 0.0
    %v633 = vmax.f32 %v611, 0.0
    %v634 = vmax.f32 %v616, 0.0
    %v635 = vmax.f32 %v621, 0.0
    %v636 = vmax.f32 %v626, 0.0
    %v637 = vld [vmem:[%s3 + $0x5] sm:$0x1]
    %v639 = vlaneseq
    %v640 = vshrl.u32 %v639, 7
    %v641 = vsub.s32 0, %v640
    %v642 = vrot.slane %v637, %v641
    %v644 = vmul.f32 %v629, %v642
    %v645 = vmul.f32 %v630, %v642
    %v646 = vmul.f32 %v631, %v642
    %v647 = vmul.f32 %v632, %v642
    %v648 = vmul.f32 %v633, %v642
    %v649 = vmul.f32 %v634, %v642
    %v650 = vmul.f32 %v635, %v642
    %v651 = vmul.f32 %v636, %v642
    %652 = vadd.xlane.f32.xlu0 %v644
    %v653 = vpop.xlane.xlu0 %652
    %654 = vadd.xlane.f32.xlu0 %v645
    %v655 = vpop.xlane.xlu0 %654
    %656 = vadd.xlane.f32.xlu0 %v646
    %v657 = vpop.xlane.xlu0 %656
    %658 = vadd.xlane.f32.xlu0 %v647
    %v659 = vpop.xlane.xlu0 %658
    %660 = vadd.xlane.f32.xlu0 %v648
    %v661 = vpop.xlane.xlu0 %660
    %662 = vadd.xlane.f32.xlu0 %v649
    %v663 = vpop.xlane.xlu0 %662
    %664 = vadd.xlane.f32.xlu0 %v650
    %v665 = vpop.xlane.xlu0 %664
    %666 = vadd.xlane.f32.xlu0 %v651
    %v667 = vpop.xlane.xlu0 %666
    %v668 = vld [vmem:[%s3 + $0x6] sm:$0x1]
    %v670 = vlaneseq
    %v671 = vshrl.u32 %v670, 7
    %v672 = vsub.s32 0, %v671
    %v673 = vrot.slane %v668, %v672
    %v675 = vadd.f32 %v653, %v673
    %v676 = vadd.f32 %v655, %v673
    %v677 = vadd.f32 %v657, %v673
    %v678 = vadd.f32 %v659, %v673
    %v679 = vadd.f32 %v661, %v673
    %v680 = vadd.f32 %v663, %v673
    %v681 = vadd.f32 %v665, %v673
    %v682 = vadd.f32 %v667, %v673
    %683 = vst [vmem:[%s4] sm:$0xff] %v591
    %684 = vst [vmem:[%s4 + $0x8] sm:$0xff] %v596
    %685 = vst [vmem:[%s4 + $0x10] sm:$0xff] %v601
    %686 = vst [vmem:[%s4 + $0x18] sm:$0xff] %v606
    %687 = vst [vmem:[%s4 + $0x20] sm:$0xff] %v611
    %688 = vst [vmem:[%s4 + $0x28] sm:$0xff] %v616
    %689 = vst [vmem:[%s4 + $0x30] sm:$0xff] %v621
    %690 = vst [vmem:[%s4 + $0x38] sm:$0xff] %v626
    %699 = vrot.lane.b32.xlu0 %v675, 127
    %v700 = vpop.permute.xlu0 %699
    %701 = vrot.lane.b32.xlu0 %v676, 127
    %v702 = vpop.permute.xlu0 %701
    %703 = vrot.lane.b32.xlu0 %v677, 127
    %v704 = vpop.permute.xlu0 %703
    %705 = vrot.lane.b32.xlu0 %v678, 127
    %v706 = vpop.permute.xlu0 %705
    %707 = vrot.lane.b32.xlu0 %v679, 127
    %v708 = vpop.permute.xlu0 %707
    %709 = vrot.lane.b32.xlu0 %v680, 127
    %v710 = vpop.permute.xlu0 %709
    %711 = vrot.lane.b32.xlu0 %v681, 127
    %v712 = vpop.permute.xlu0 %711
    %713 = vrot.lane.b32.xlu0 %v682, 127
    %v714 = vpop.permute.xlu0 %713
    %vm723 = vcmask 1048568
    %724 = vst.msk [vmem:[%s4] sm:$0xff] %vm723, %v700
    %725 = vst.msk [vmem:[%s4 + $0x8] sm:$0xff] %vm723, %v702
    %726 = vst.msk [vmem:[%s4 + $0x10] sm:$0xff] %vm723, %v704
    %727 = vst.msk [vmem:[%s4 + $0x18] sm:$0xff] %vm723, %v706
    %728 = vst.msk [vmem:[%s4 + $0x20] sm:$0xff] %vm723, %v708
    %729 = vst.msk [vmem:[%s4 + $0x28] sm:$0xff] %vm723, %v710
    %730 = vst.msk [vmem:[%s4 + $0x30] sm:$0xff] %vm723, %v712
    %731 = vst.msk [vmem:[%s4 + $0x38] sm:$0xff] %vm723, %v714
    // Predicated region
    $region22: #{_lambda_.1} parent=1 // pred_check
      _
    $region23: #{_lambda_.1} parent=1 // pred_check_branch
      %733 = sbr.rel (0) target = $region25
    $region24: #{_lambda_.1} parent=1 // pred_region
      _
    $region25: #{_lambda_.1} parent=1 // pred_fallthru
      _
    // Predicated region
    $region26: #{_lambda_.1} parent=1 // pred_check
      _
    $region27: #{_lambda_.1} parent=1 // pred_check_branch
      %735 = sbr.rel (0) target = $region29
    $region28: #{_lambda_.1} parent=1 // pred_region
      _
    $region29: #{_lambda_.1} parent=1 // pred_fallthru
      _
    %736 = vsyncpa [#allocation3], 1

</llo_original>
